<compile_context>
chip_gen: v7x
topology: tpu7x:2x2x1
jax: 0.10.0
libtpu: 0.0.40
codegen_flags: <defaults>
</compile_context>

<pallas_src>
import functools

import jax
import jax.numpy as jnp
import numpy as np
from jax.experimental import pallas as pl
from jax.experimental.pallas import tpu as pltpu


def _wfl_kernel(logits_ref, labels_ref, weights_ref, out_ref, *,
                gamma, label_smoothing, n_valid, tile_n):
    """One grid step: `tile_n` samples -> one per-tile partial focal-loss sum.

    logits_ref : (tile_n, C)  natural sample-major layout -> fully contiguous HBM DMA
    labels_ref : (1, tile_n)  int32
    weights_ref: (C, 1)       per-class weights, f32 (grid-resident)
    out_ref    : (1, 128)     this tile's partial focal-loss sum in lane 0
    """
    x_nc = logits_ref[...].astype(jnp.float32)            # (T, C)  cast in-kernel only
    # Relayout to lane-dense compute: samples on the 128-lane axis, classes on
    # sublanes.  The XLU (transpose unit) is otherwise idle in this kernel.
    x = jnp.transpose(x_nc)                                # (C, T)
    labels = labels_ref[...]                               # (1, T)
    w = weights_ref[...].astype(jnp.float32)               # (C, 1)
    c = x.shape[0]

    # numerically stable log-sum-exp over the class (sublane) axis
    m = jnp.max(x, axis=0, keepdims=True)                                 # (1, T)
    lse = jnp.log(jnp.sum(jnp.exp(x - m), axis=0, keepdims=True)) + m     # (1, T)
    # -log p_{c,i} = lse_i - x_{c,i}

    # fused label-smoothed weighted CE (single class reduction):
    #   blend_c = ((1-eps) * onehot_c + eps/C) * w_c
    w_hi = (1.0 - label_smoothing + label_smoothing / c) * w              # (C, 1)
    w_lo = (label_smoothing / c) * w                                      # (C, 1)
    class_ids = jax.lax.broadcasted_iota(jnp.int32, x.shape, 0)           # (C, T)
    bw = jnp.where(class_ids == labels, w_hi, w_lo)                       # (C, T)
    ce = jnp.sum(bw * (lse - x), axis=0, keepdims=True)                   # (1, T)

    # focal modulation: (1 - exp(-ce))**gamma  -- same formula as the PyTorch module
    one_minus_pt = 1.0 - jnp.exp(-ce)
    g = float(gamma)
    if g == 2.0:
        modulator = one_minus_pt * one_minus_pt
    elif g.is_integer() and g >= 0.0:
        modulator = jnp.ones_like(one_minus_pt)
        for _ in range(int(g)):
            modulator = modulator * one_minus_pt
    else:
        # non-integer gamma via exp/log on the EUP, guarded against non-positive base
        # TODO(synk): PyTorch gives NaN for (1-pt) < 0 (only possible with negative
        # class weights); we clamp that case to 0 instead.
        safe = jnp.maximum(one_minus_pt, jnp.float32(1e-30))
        modulator = jnp.where(one_minus_pt > 0.0,
                              jnp.exp(g * jnp.log(safe)),
                              jnp.zeros_like(one_minus_pt))

    focal = modulator * ce                                                # (1, T)

    # ragged tail: mask with a select (never a multiply) so inf/NaN garbage from the
    # partially-out-of-bounds edge block cannot leak into the partial sum.
    start = pl.program_id(0) * tile_n
    sample_ids = start + jax.lax.broadcasted_iota(jnp.int32, focal.shape, 1)
    focal = jnp.where(sample_ids < n_valid, focal, 0.0)

    # per-tile partial sum, written to lane 0 of this step's private (1, 128) slot
    tile_sum = jnp.sum(focal)
    lane_ids = jax.lax.broadcasted_iota(jnp.int32, (1, 128), 1)
    out_ref[...] = jnp.where(lane_ids == 0, tile_sum, 0.0)


def weighted_focal_loss(logits, labels, weights, *, gamma=2.0, label_smoothing=0.1):
    """logits: (N, C), labels: (N,) int, weights: (C,) -> scalar focal loss."""
    n, c = logits.shape
    itemsize = jnp.dtype(logits.dtype).itemsize

    # ---- VMEM-aware tile sizing (double-buffer + in-kernel temporaries) ----------
    try:
        vmem_cap = int(pltpu.get_tpu_info().vmem_capacity_bytes)
    except Exception:
        vmem_cap = 64 * 1024 * 1024          # v7x physical capacity; safe lower bound
    tile_budget = int(vmem_cap * 0.40)       # budget for logits buffers + temporaries
    vmem_limit = int(vmem_cap * 0.80)        # raised scoped-VMEM limit (2x headroom)

    c_lanes = pl.cdiv(c, 128) * 128          # lane padding of the (T, C) VMEM block
    c_sub = pl.cdiv(c, 8) * 8                # sublane padding of (C, T) temporaries
    bytes_per_sample = (
        2 * c_lanes * itemsize               # double-buffered logits input block
        + c_lanes * 4                        # f32 copy of the block before transpose
        + 4 * c_sub * 4                      # (C, T) f32 temporaries (x^T, iota, bw, ...)
        + 2 * 8 * 4                          # labels block padded to 8 sublanes, x2 bufs
        + 10 * 4                             # (1, T) rows: m, lse, ce, focal, masks, ...
    )

    if n < 128:
        tile_n = n                           # single block == full array (always legal)
    else:
        budget_tile = max(128, min(tile_budget // bytes_per_sample, 32768) // 128 * 128)
        two_way = max(128, pl.cdiv(pl.cdiv(n, 2), 128) * 128)  # >= 2 steps for v7x megacore
        tile_n = min(budget_tile, (n // 128) * 128, two_way)
    num_tiles = pl.cdiv(n, tile_n)

    labels2d = labels.reshape(1, n).astype(jnp.int32)          # free reshape, no padding
    weights2d = weights.reshape(c, 1).astype(jnp.float32)

    kernel = functools.partial(_wfl_kernel, gamma=gamma,
                               label_smoothing=label_smoothing,
                               n_valid=n, tile_n=tile_n)

    partials = pl.pallas_call(
        kernel,
        out_shape=jax.ShapeDtypeStruct((1, num_tiles * 128), jnp.float32),
        grid=(num_tiles,),
        in_specs=[
            pl.BlockSpec((tile_n, c), lambda i: (i, 0)),   # contiguous (T, C) slab
            pl.BlockSpec((1, tile_n), lambda i: (0, i)),   # labels tile
            pl.BlockSpec((c, 1), lambda i: (0, 0)),        # per-class weights (resident)
        ],
        out_specs=pl.BlockSpec((1, 128), lambda i: (0, i)),
        compiler_params=pltpu.CompilerParams(
            dimension_semantics=("parallel",),             # megacore-shardable on v7x
            vmem_limit_bytes=vmem_limit,
        ),
        cost_estimate=pl.CostEstimate(
            flops=int(10 * n * c + 12 * n),
            transcendentals=int(n * c + 2 * n),
            bytes_accessed=int(n * c * itemsize + 4 * n + 4 * c + 512 * num_tiles),
        ),
    )(logits, labels2d, weights2d)

    # trivial epilogue: only lane 0 of each tile slot is non-zero
    return jnp.sum(partials) / n


def reference_focal_loss(logits, labels, weights, gamma=2.0, label_smoothing=0.1):
    """Pure-JAX mirror of the PyTorch formula, for a correctness check."""
    n, c = logits.shape
    logp = jax.nn.log_softmax(logits.astype(jnp.float32), axis=-1)
    onehot = jax.nn.one_hot(labels, c, dtype=jnp.float32)
    neg_wlogp = -(logp * weights[None, :].astype(jnp.float32))
    nll = jnp.sum(onehot * neg_wlogp, axis=-1)
    smooth = jnp.sum(neg_wlogp, axis=-1)
    ce = (1.0 - label_smoothing) * nll + (label_smoothing / c) * smooth
    pt = jnp.exp(-ce)
    return jnp.mean((1.0 - pt) ** gamma * ce)


if __name__ == "__main__":
    key = jax.random.PRNGKey(0)

    def run_case(n, c):
        k1, k2 = jax.random.split(jax.random.fold_in(key, n * 131 + c))
        logits = jax.random.normal(k1, (n, c), dtype=jnp.float32) * 2.0
        labels = jax.random.randint(k2, (n,), 0, c, dtype=jnp.int32)
        weights = jnp.linspace(0.5, 1.5, c, dtype=jnp.float32)

        loss = weighted_focal_loss(logits, labels, weights)
        jax.block_until_ready(loss)

        ref = reference_focal_loss(logits, labels, weights)
        np.testing.assert_allclose(np.asarray(loss), np.asarray(ref),
                                   rtol=5e-5, atol=1e-6)

    run_case(384, 8)    # 2 grid steps (256 + ragged 128-wide edge block)
    run_case(200, 16)   # ragged final tile, larger class count

    print("KERNEL_OK")
</pallas_src>

<mosaic_0001>
module attributes {stable_mosaic.version = 11 : i64} {
  func.func @_wfl_kernel(%arg0: i32, %arg1: memref<256x8xf32, #tpu.memory_space<vmem>>, %arg2: memref<1x256xi32, #tpu.memory_space<vmem>>, %arg3: memref<8x1xf32, #tpu.memory_space<vmem>>, %arg4: memref<1x128xf32, #tpu.memory_space<vmem>>) attributes {dimension_semantics = [#tpu.dimension_semantics<parallel>], iteration_bounds = array<i64: 2>, scalar_prefetch = 0 : i64, scratch_operands = 0 : i64, tpu.core_type = #tpu.core_type<tc>, window_params = [{transform_indices = @transform_0, window_bounds = array<i64: 256, 8>}, {transform_indices = @transform_1, window_bounds = array<i64: 1, 256>}, {pipeline_mode = #tpu.pipeline_mode<synchronous>, transform_indices = @transform_2, window_bounds = array<i64: 8, 1>}, {transform_indices = @transform_3, window_bounds = array<i64: 1, 128>}]} {
    %c0 = arith.constant 0 : index
    %c0_0 = arith.constant 0 : index
    %0 = vector.load %arg1[%c0, %c0_0] : memref<256x8xf32, #tpu.memory_space<vmem>>, vector<256x8xf32>
    %1 = tpu.transpose %0, [1, 0] : vector<256x8xf32> -> vector<8x256xf32>
    %c0_1 = arith.constant 0 : index
    %c0_2 = arith.constant 0 : index
    %2 = vector.load %arg2[%c0_1, %c0_2] : memref<1x256xi32, #tpu.memory_space<vmem>>, vector<1x256xi32>
    %c0_3 = arith.constant 0 : index
    %c0_4 = arith.constant 0 : index
    %3 = vector.load %arg3[%c0_3, %c0_4] : memref<8x1xf32, #tpu.memory_space<vmem>>, vector<8x1xf32>
    %cst = arith.constant dense<0xFF800000> : vector<256xf32>
    %4 = vector.multi_reduction <maximumf>, %1, %cst [0] : vector<8x256xf32> to vector<256xf32>
    %5 = vector.shape_cast %4 : vector<256xf32> to vector<1x256xf32>
    %6 = vector.broadcast %5 : vector<1x256xf32> to vector<8x256xf32>
    %7 = arith.subf %1, %6 : vector<8x256xf32>
    %8 = math.exp %7 : vector<8x256xf32>
    %cst_5 = arith.constant dense<0.000000e+00> : vector<256xf32>
    %9 = vector.multi_reduction <add>, %8, %cst_5 [0] : vector<8x256xf32> to vector<256xf32>
    %10 = vector.shape_cast %9 : vector<256xf32> to vector<1x256xf32>
    %11 = math.log %10 : vector<1x256xf32>
    %12 = arith.addf %11, %5 : vector<1x256xf32>
    %cst_6 = arith.constant 9.125000e-01 : f32
    %13 = vector.broadcast %cst_6 : f32 to vector<8x1xf32>
    %14 = arith.mulf %13, %3 : vector<8x1xf32>
    %cst_7 = arith.constant 1.250000e-02 : f32
    %15 = vector.broadcast %cst_7 : f32 to vector<8x1xf32>
    %16 = arith.mulf %15, %3 : vector<8x1xf32>
    %17 = tpu.iota {dimensions = array<i32: 0>} : vector<8x256xi32>
    %18 = vector.broadcast %2 : vector<1x256xi32> to vector<8x256xi32>
    %19 = arith.cmpi eq, %17, %18 : vector<8x256xi32>
    %20 = vector.shape_cast %14 : vector<8x1xf32> to vector<8x1xf32>
    %21 = vector.broadcast %20 : vector<8x1xf32> to vector<8x256xf32>
    %22 = vector.shape_cast %16 : vector<8x1xf32> to vector<8x1xf32>
    %23 = vector.broadcast %22 : vector<8x1xf32> to vector<8x256xf32>
    %24 = arith.select %19, %21, %23 : vector<8x256xi1>, vector<8x256xf32>
    %25 = vector.broadcast %12 : vector<1x256xf32> to vector<8x256xf32>
    %26 = arith.subf %25, %1 : vector<8x256xf32>
    %27 = arith.mulf %24, %26 : vector<8x256xf32>
    %cst_8 = arith.constant dense<0.000000e+00> : vector<256xf32>
    %28 = vector.multi_reduction <add>, %27, %cst_8 [0] : vector<8x256xf32> to vector<256xf32>
    %29 = vector.shape_cast %28 : vector<256xf32> to vector<1x256xf32>
    %cst_9 = arith.constant 0.000000e+00 : f32
    %30 = vector.broadcast %cst_9 : f32 to vector<1x256xf32>
    %31 = arith.subf %30, %29 : vector<1x256xf32>
    %32 = math.exp %31 : vector<1x256xf32>
    %cst_10 = arith.constant 1.000000e+00 : f32
    %33 = vector.broadcast %cst_10 : f32 to vector<1x256xf32>
    %34 = arith.subf %33, %32 : vector<1x256xf32>
    %35 = arith.mulf %34, %34 : vector<1x256xf32>
    %36 = arith.mulf %35, %29 : vector<1x256xf32>
    %c256_i32 = arith.constant 256 : i32
    %37 = arith.muli %arg0, %c256_i32 : i32
    %38 = tpu.iota {dimensions = array<i32: 1>} : vector<1x256xi32>
    %39 = vector.broadcast %37 : i32 to vector<1x256xi32>
    %40 = arith.addi %39, %38 : vector<1x256xi32>
    %c384_i32 = arith.constant 384 : i32
    %41 = vector.broadcast %c384_i32 : i32 to vector<1x256xi32>
    %42 = arith.cmpi slt, %40, %41 : vector<1x256xi32>
    %cst_11 = arith.constant 0.000000e+00 : f32
    %43 = vector.broadcast %cst_11 : f32 to vector<1x256xf32>
    %44 = arith.select %42, %36, %43 : vector<1x256xi1>, vector<1x256xf32>
    %45 = vector.shape_cast %44 : vector<1x256xf32> to vector<1x1x256xf32>
    %cst_12 = arith.constant dense<0.000000e+00> : vector<1xf32>
    %46 = vector.multi_reduction <add>, %45, %cst_12 [1, 2] : vector<1x1x256xf32> to vector<1xf32>
    %47 = vector.shape_cast %46 : vector<1xf32> to vector<1x1x1xf32>
    %48 = vector.extract %47[0, 0, 0] : f32 from vector<1x1x1xf32>
    %49 = tpu.iota {dimensions = array<i32: 1>} : vector<1x128xi32>
    %c0_i32 = arith.constant 0 : i32
    %50 = vector.broadcast %c0_i32 : i32 to vector<1x128xi32>
    %51 = arith.cmpi eq, %49, %50 : vector<1x128xi32>
    %cst_13 = arith.constant 0.000000e+00 : f32
    %52 = vector.broadcast %48 : f32 to vector<1x128xf32>
    %53 = vector.broadcast %cst_13 : f32 to vector<1x128xf32>
    %54 = arith.select %51, %52, %53 : vector<1x128xi1>, vector<1x128xf32>
    %c0_14 = arith.constant 0 : index
    %c0_15 = arith.constant 0 : index
    %55 = vector.load %arg4[%c0_14, %c0_15] : memref<1x128xf32, #tpu.memory_space<vmem>>, vector<1x128xf32>
    tpu.vector_store %arg4[%c0_14, %c0_15], %54 {strides = array<i32>} : memref<1x128xf32, #tpu.memory_space<vmem>>, vector<1x128xf32>,
    return
  }
  func.func @transform_0(%arg0: i32) -> (i32, i32) {
    %c0_i32 = arith.constant 0 : i32
    %c0_i32_0 = arith.constant 0 : i32
    return %arg0, %c0_i32 : i32, i32
  }
  func.func @transform_1(%arg0: i32) -> (i32, i32) {
    %c0_i32 = arith.constant 0 : i32
    %c0_i32_0 = arith.constant 0 : i32
    return %c0_i32, %arg0 : i32, i32
  }
  func.func @transform_2(%arg0: i32) -> (i32, i32) {
    %c0_i32 = arith.constant 0 : i32
    %c0_i32_0 = arith.constant 0 : i32
    %c0_i32_1 = arith.constant 0 : i32
    return %c0_i32, %c0_i32_0 : i32, i32
  }
  func.func @transform_3(%arg0: i32) -> (i32, i32) {
    %c0_i32 = arith.constant 0 : i32
    %c0_i32_0 = arith.constant 0 : i32
    return %c0_i32, %arg0 : i32, i32
  }
}

</mosaic_0001>

<llo_original>
// kernel: tpu_custom_call.1
$region0: #{tpu_custom_call.1}
  #allocation0 [shape = 'u32[]', space=smem, size = 0x4, offset = 0x4, fixed_abs, tag = 'smem constant byte address 0x4 - core index']
  #allocation1 [shape = 'u32[144,128]{1,0:T(1,128)}', space=vmem, size = 0x12000, scoped, tag = 'internal scratch']
  %s0 = inlined_call_operand.vmem [shape: f32[384,8], index: 0, kind: input, shape index: {}]
  %s1 = inlined_call_operand.vmem [shape: s32[1,384], index: 1, kind: input, shape index: {}]
  %s2 = inlined_call_operand.vmem [shape: f32[8,1], index: 2, kind: input, shape index: {}]
  %s3 = inlined_call_operand.hbm [shape: f32[1,256], index: 3, kind: output, shape index: {}]
  %s4 = sld [smem:[#allocation0]]
  $region45: #{tpu_custom_call.1} parent=0
    _
  %s6 = ssub.s32 1, %s4
  %s7 = scalar_select 0, %s6, %s4
  $region1: #{tpu_custom_call.1} parent=0
    #allocation2 [shape = 'u8[1024]{0}', space=vmem, size = 0x400, scoped, tag = 'output window, operand 0']
    #allocation3 [shape = 's32[2]{0}', space=sflag, size = 0x8, scoped, tag = 'scoped memory for tpu_custom_call.1']
    %8 = vsyncpa [#allocation3], 0
    %s9 = scalar_lea.sflag [#allocation3], 1
    %10 = vsyncpa %s9, 0
    loop: start=0, step=1, limit=4
    $region2: #{tpu_custom_call.1} parent=1 // loop_pre_header
      _
    $region3: #{tpu_custom_call.1} parent=1 // loop_header
      %s12 = sphi 0, %s16
      %p13 = scmp.ge.s32.totalorder %s12, 4
      %s22 = sphi 0, %s24
      %s25 = sphi 0, %s22
      %s26 = sphi 0, %s25
      %s42 = sphi 0, %s26
      %s48 = sphi 0, %s50
      %s51 = sphi 0, %s48
      %s52 = sphi 0, %s51
      %s68 = sphi 0, %s52
      %s72 = sphi 0, %s72
      %s74 = sphi 0, %s72
      %s75 = sphi 0, %s74
      %s89 = sphi 0, %s75
      %s95 = sphi 0, %s97
      %s98 = sphi 0, %s95
      %s99 = sphi 0, %s98
      %s115 = sphi 0, %s99
    $region4: #{tpu_custom_call.1} parent=1 // loop_header_branch
      %15 = sbr.rel (%p13) target = $region8
    $region5: #{tpu_custom_call.1} parent=1 // loop_body
      %s17 = ssub.s32 %s12, 1
      %s18 = ssub.s32 %s12, 2
      %s19 = sadd.s32 %s12, 1
      %s20 = ssub.s32 %s12, %s19
      %p21 = scmp.eq.s32.totalorder %s20, 0
      %s23 = sadd.s32 %s22, 1
      %s24 = scalar_select %p21, %s22, %s23
      %p27 = pneg %p21
      %p28 = scmp.eq.s32.totalorder %s12, 1
      %p29 = por %p27, %p28
      %p30 = scmp.ne.s32.totalorder %s22, %s25
      %p31 = scmp.eq.s32.totalorder %s12, 0
      %p32 = por %p30, %p31
      %p33 = scmp.ne.s32.totalorder %s22, %s25
      %p34 = scmp.eq.s32.totalorder %s17, 1
      %p35 = por %p33, %p34
      %p36 = scmp.ne.s32.totalorder %s25, %s26
      %p37 = scmp.eq.s32.totalorder %s17, 0
      %p38 = por %p36, %p37
      %p39 = scmp.ne.s32.totalorder %s25, %s26
      %p40 = scmp.eq.s32.totalorder %s18, 1
      %p41 = por %p39, %p40
      %p43 = scmp.ne.s32.totalorder %s26, %s42
      %p44 = scmp.eq.s32.totalorder %s18, 0
      %p45 = por %p43, %p44
      %s46 = ssub.s32 %s12, %s19
      %p47 = scmp.eq.s32.totalorder %s46, 0
      %s49 = sadd.s32 %s48, 1
      %s50 = scalar_select %p47, %s48, %s49
      %p53 = pneg %p47
      %p54 = scmp.eq.s32.totalorder %s12, 1
      %p55 = por %p53, %p54
      %p56 = scmp.ne.s32.totalorder %s48, %s51
      %p57 = scmp.eq.s32.totalorder %s12, 0
      %p58 = por %p56, %p57
      %p59 = scmp.ne.s32.totalorder %s48, %s51
      %p60 = scmp.eq.s32.totalorder %s17, 1
      %p61 = por %p59, %p60
      %p62 = scmp.ne.s32.totalorder %s51, %s52
      %p63 = scmp.eq.s32.totalorder %s17, 0
      %p64 = por %p62, %p63
      %p65 = scmp.ne.s32.totalorder %s51, %s52
      %p66 = scmp.eq.s32.totalorder %s18, 1
      %p67 = por %p65, %p66
      %p69 = scmp.ne.s32.totalorder %s52, %s68
      %p70 = scmp.eq.s32.totalorder %s18, 0
      %p71 = por %p69, %p70
      %s73 = sadd.s32 %s72, 1
      %p76 = scmp.eq.s32.totalorder %s12, 1
      %p77 = scmp.ne.s32.totalorder %s72, %s74
      %p78 = scmp.eq.s32.totalorder %s12, 0
      %p79 = por %p77, %p78
      %p80 = scmp.ne.s32.totalorder %s72, %s74
      %p81 = scmp.eq.s32.totalorder %s17, 1
      %p82 = por %p80, %p81
      %p83 = scmp.ne.s32.totalorder %s74, %s75
      %p84 = scmp.eq.s32.totalorder %s17, 0
      %p85 = por %p83, %p84
      %p86 = scmp.ne.s32.totalorder %s74, %s75
      %p87 = scmp.eq.s32.totalorder %s18, 1
      %p88 = por %p86, %p87
      %p90 = scmp.ne.s32.totalorder %s75, %s89
      %p91 = scmp.eq.s32.totalorder %s18, 0
      %p92 = por %p90, %p91
      %s93 = ssub.s32 %s12, %s19
      %p94 = scmp.eq.s32.totalorder %s93, 0
      %s96 = sadd.s32 %s95, 1
      %s97 = scalar_select %p94, %s95, %s96
      %p100 = pneg %p94
      %p101 = scmp.eq.s32.totalorder %s12, 1
      %p102 = por %p100, %p101
      %p103 = scmp.ne.s32.totalorder %s95, %s98
      %p104 = scmp.eq.s32.totalorder %s12, 0
      %p105 = por %p103, %p104
      %p106 = scmp.ne.s32.totalorder %s95, %s98
      %p107 = scmp.eq.s32.totalorder %s17, 1
      %p108 = por %p106, %p107
      %p109 = scmp.ne.s32.totalorder %s98, %s99
      %p110 = scmp.eq.s32.totalorder %s17, 0
      %p111 = por %p109, %p110
      %p112 = scmp.ne.s32.totalorder %s98, %s99
      %p113 = scmp.eq.s32.totalorder %s18, 1
      %p114 = por %p112, %p113
      %p116 = scmp.ne.s32.totalorder %s99, %s115
      %p117 = scmp.eq.s32.totalorder %s18, 0
      %p118 = por %p116, %p117
      %p119 = scmp.le.s32.totalorder 1, %s12
      %p120 = scmp.lt.s32.totalorder %s12, 3
      %p121 = pnand %p119, %p120
      %p122 = pneg %p121
      // Predicated region
      $region9: #{tpu_custom_call.1} parent=5 // pred_check
        _
      $region10: #{tpu_custom_call.1} parent=5 // pred_check_branch
        %124 = sbr.rel (%p121) target = $region12
      $region11: #{tpu_custom_call.1} parent=5 // pred_region
        %s125 = ssub.s32 %s12, 1
        // Predicated region
        $region13: #{tpu_custom_call.1} parent=11 // pred_check
          %p126 = pneg %p85
        $region14: #{tpu_custom_call.1} parent=11 // pred_check_branch
          %128 = sbr.rel (%p126) target = $region16
        $region15: #{tpu_custom_call.1} parent=11 // pred_region
          _
        $region16: #{tpu_custom_call.1} parent=11 // pred_fallthru
          _
      $region12: #{tpu_custom_call.1} parent=5 // pred_fallthru
        _
      %p129 = scmp.lt.s32.totalorder %s12, 2
      // Predicated region
      $region17: #{tpu_custom_call.1} parent=5 // pred_check
        %p130 = pneg %p129
      $region18: #{tpu_custom_call.1} parent=5 // pred_check_branch
        %132 = sbr.rel (%p130) target = $region20
      $region19: #{tpu_custom_call.1} parent=5 // pred_region
        // Predicated region
        $region21: #{tpu_custom_call.1} parent=19 // pred_check
          %p133 = pneg %p32
        $region22: #{tpu_custom_call.1} parent=19 // pred_check_branch
          %135 = sbr.rel (%p133) target = $region24
        $region23: #{tpu_custom_call.1} parent=19 // pred_region
          %s136 = smul.u32 32, %s12
          %s137 = ssub.s32 48, %s136
          %p138 = scmp.lt.s32.totalorder %s137, 32
          %s139 = scalar_select %p138, %s137, 32
          %s140 = smul.u32 128, %s139
          %p141 = scmp.lt.s32.totalorder %s136, 47
          %s142 = scalar_select %p141, %s136, 47
          %s143 = smul.addr %s142, 8
          %s144 = scalar_lea.vmem %s0, %s143
          %s145 = smul.u32 32, %s12
          %s146 = ssub.s32 48, %s145
          %p147 = scmp.lt.s32.totalorder %s146, 32
          %s148 = scalar_select %p147, %s146, 32
          %s149 = smul.u32 128, %s148
        $region24: #{tpu_custom_call.1} parent=19 // pred_fallthru
          _
        // Predicated region
        $region25: #{tpu_custom_call.1} parent=19 // pred_check
          %p150 = pneg %p58
        $region26: #{tpu_custom_call.1} parent=19 // pred_check_branch
          %152 = sbr.rel (%p150) target = $region28
        $region27: #{tpu_custom_call.1} parent=19 // pred_region
          %s153 = smul.u32 2, %s12
          %s154 = ssub.s32 3, %s153
          %p155 = scmp.lt.s32.totalorder %s154, 2
          %s156 = scalar_select %p155, %s154, 2
          %s157 = smul.u32 16, %s156
          %p158 = scmp.lt.s32.totalorder %s153, 2
          %s159 = scalar_select %p158, %s153, 2
          %s160 = scalar_lea.vmem %s1, %s159
          %s161 = smul.u32 2, %s12
          %s162 = ssub.s32 3, %s161
          %p163 = scmp.lt.s32.totalorder %s162, 2
          %s164 = scalar_select %p163, %s162, 2
          %s165 = smul.u32 16, %s164
        $region28: #{tpu_custom_call.1} parent=19 // pred_fallthru
          _
      $region20: #{tpu_custom_call.1} parent=5 // pred_fallthru
        _
      %p166 = scmp.le.s32.totalorder 1, %s12
      %p167 = scmp.lt.s32.totalorder %s12, 3
      %p168 = pnand %p166, %p167
      %p169 = pneg %p168
      // Predicated region
      $region29: #{tpu_custom_call.1} parent=5 // pred_check
        _
      $region30: #{tpu_custom_call.1} parent=5 // pred_check_branch
        %171 = sbr.rel (%p168) target = $region32
      $region31: #{tpu_custom_call.1} parent=5 // pred_region
        %s172 = ssub.s32 %s12, 1
        %s173 = smul.u32 32, %s17
        %s174 = ssub.s32 48, %s173
        %p175 = scmp.lt.s32.totalorder %s174, 32
        %s176 = scalar_select %p175, %s174, 32
        %s177 = smul.u32 128, %s176
        %p178 = scmp.lt.s32.totalorder %s173, 47
        %s179 = scalar_select %p178, %s173, 47
        %s180 = smul.addr %s179, 8
        %s181 = scalar_lea.vmem %s0, %s180
        %p182 = pneg %p38
        %p183 = pneg %p35
        %s184 = smul.u32 2, %s17
        %s185 = ssub.s32 3, %s184
        %p186 = scmp.lt.s32.totalorder %s185, 2
        %s187 = scalar_select %p186, %s185, 2
        %s188 = smul.u32 16, %s187
        %p189 = scmp.lt.s32.totalorder %s184, 2
        %s190 = scalar_select %p189, %s184, 2
        %s191 = scalar_lea.vmem %s1, %s190
        %p192 = pneg %p64
        %p193 = pneg %p61
        %p194 = pneg %p85
        %p195 = pneg %p82
        %p196 = pneg %p111
        %p197 = pneg %p108
        %s198 = sand.u32 %s98, 1
        %s199 = scalar_lea.sflag [#allocation3], %s198
        %s200 = sand.u32 %s98, 1
        %s201 = scalar_lea.vmem [#allocation2], %s200
        %s202 = smul.u32 32, %s17
        %s203 = ssub.s32 48, %s202
        %p204 = scmp.lt.s32.totalorder %s203, 32
        %s205 = scalar_select %p204, %s203, 32
        %s206 = smul.u32 128, %s205
        %p207 = scmp.lt.s32.totalorder %s202, 47
        %s208 = scalar_select %p207, %s202, 47
        %s209 = smul.addr %s208, 8
        %s210 = scalar_lea.vmem %s0, %s209
        %s211 = smul.u32 32, %s17
        %s212 = ssub.s32 48, %s211
        %p213 = scmp.lt.s32.totalorder %s212, 32
        %s214 = scalar_select %p213, %s212, 32
        %s215 = smul.u32 128, %s214
        %s216 = smul.u32 2, %s17
        %s217 = ssub.s32 3, %s216
        %p218 = scmp.lt.s32.totalorder %s217, 2
        %s219 = scalar_select %p218, %s217, 2
        %s220 = smul.u32 16, %s219
        %p221 = scmp.lt.s32.totalorder %s216, 2
        %s222 = scalar_select %p221, %s216, 2
        %s223 = scalar_lea.vmem %s1, %s222
        %s224 = smul.u32 2, %s17
        %s225 = ssub.s32 3, %s224
        %p226 = scmp.lt.s32.totalorder %s225, 2
        %s227 = scalar_select %p226, %s225, 2
        %s228 = smul.u32 16, %s227
        %v229 = vld [vmem:[%s210] sm:$0xff]
        %v230 = vld [vmem:[%s210 + $0x8] sm:$0xff]
        %v231 = vld [vmem:[%s210 + $0x10] sm:$0xff]
        %v232 = vld [vmem:[%s210 + $0x18] sm:$0xff]
        %v233 = vld [vmem:[%s210 + $0x20] sm:$0xff]
        %v234 = vld [vmem:[%s210 + $0x28] sm:$0xff]
        %v235 = vld [vmem:[%s210 + $0x30] sm:$0xff]
        %v236 = vld [vmem:[%s210 + $0x38] sm:$0xff]
        %v237 = vld [vmem:[%s210 + $0x40] sm:$0xff]
        %v238 = vld [vmem:[%s210 + $0x48] sm:$0xff]
        %v239 = vld [vmem:[%s210 + $0x50] sm:$0xff]
        %v240 = vld [vmem:[%s210 + $0x58] sm:$0xff]
        %v241 = vld [vmem:[%s210 + $0x60] sm:$0xff]
        %v242 = vld [vmem:[%s210 + $0x68] sm:$0xff]
        %v243 = vld [vmem:[%s210 + $0x70] sm:$0xff]
        %v244 = vld [vmem:[%s210 + $0x78] sm:$0xff]
        %v245 = vld [vmem:[%s210 + $0x80] sm:$0xff]
        %v246 = vld [vmem:[%s210 + $0x88] sm:$0xff]
        %v247 = vld [vmem:[%s210 + $0x90] sm:$0xff]
        %v248 = vld [vmem:[%s210 + $0x98] sm:$0xff]
        %v249 = vld [vmem:[%s210 + $0xa0] sm:$0xff]
        %v250 = vld [vmem:[%s210 + $0xa8] sm:$0xff]
        %v251 = vld [vmem:[%s210 + $0xb0] sm:$0xff]
        %v252 = vld [vmem:[%s210 + $0xb8] sm:$0xff]
        %v253 = vld [vmem:[%s210 + $0xc0] sm:$0xff]
        %v254 = vld [vmem:[%s210 + $0xc8] sm:$0xff]
        %v255 = vld [vmem:[%s210 + $0xd0] sm:$0xff]
        %v256 = vld [vmem:[%s210 + $0xd8] sm:$0xff]
        %v257 = vld [vmem:[%s210 + $0xe0] sm:$0xff]
        %v258 = vld [vmem:[%s210 + $0xe8] sm:$0xff]
        %v259 = vld [vmem:[%s210 + $0xf0] sm:$0xff]
        %v260 = vld [vmem:[%s210 + $0xf8] sm:$0xff]
        %261 = vxpose.xlu0.b32.start [1/16] %v229, 128
        %262 = vxpose.xlu0.b32.cont [2/16] %v230, 128
        %263 = vxpose.xlu0.b32.cont [3/16] %v231, 128
        %264 = vxpose.xlu0.b32.cont [4/16] %v232, 128
        %265 = vxpose.xlu0.b32.cont [5/16] %v233, 128
        %266 = vxpose.xlu0.b32.cont [6/16] %v234, 128
        %267 = vxpose.xlu0.b32.cont [7/16] %v235, 128
        %268 = vxpose.xlu0.b32.cont [8/16] %v236, 128
        %269 = vxpose.xlu0.b32.cont [9/16] %v237, 128
        %270 = vxpose.xlu0.b32.cont [10/16] %v238, 128
        %271 = vxpose.xlu0.b32.cont [11/16] %v239, 128
        %272 = vxpose.xlu0.b32.cont [12/16] %v240, 128
        %273 = vxpose.xlu0.b32.cont [13/16] %v241, 128
        %274 = vxpose.xlu0.b32.cont [14/16] %v242, 128
        %275 = vxpose.xlu0.b32.cont [15/16] %v243, 128
        %276 = vxpose.xlu0.b32.end [16/16] %v244, 128
        %v277 = vpop.trf.xlu0
        %v278 = vpop.trf.xlu0
        %v279 = vpop.trf.xlu0
        %v280 = vpop.trf.xlu0
        %v281 = vpop.trf.xlu0
        %v282 = vpop.trf.xlu0
        %v283 = vpop.trf.xlu0
        %v284 = vpop.trf.xlu0
        %v285 = vpop.trf.xlu0
        %v286 = vpop.trf.xlu0
        %v287 = vpop.trf.xlu0
        %v288 = vpop.trf.xlu0
        %v289 = vpop.trf.xlu0
        %v290 = vpop.trf.xlu0
        %v291 = vpop.trf.xlu0
        %v292 = vpop.trf.xlu0
        %293 = vxpose.xlu0.b32.start [1/16] %v245, 128
        %294 = vxpose.xlu0.b32.cont [2/16] %v246, 128
        %295 = vxpose.xlu0.b32.cont [3/16] %v247, 128
        %296 = vxpose.xlu0.b32.cont [4/16] %v248, 128
        %297 = vxpose.xlu0.b32.cont [5/16] %v249, 128
        %298 = vxpose.xlu0.b32.cont [6/16] %v250, 128
        %299 = vxpose.xlu0.b32.cont [7/16] %v251, 128
        %300 = vxpose.xlu0.b32.cont [8/16] %v252, 128
        %301 = vxpose.xlu0.b32.cont [9/16] %v253, 128
        %302 = vxpose.xlu0.b32.cont [10/16] %v254, 128
        %303 = vxpose.xlu0.b32.cont [11/16] %v255, 128
        %304 = vxpose.xlu0.b32.cont [12/16] %v256, 128
        %305 = vxpose.xlu0.b32.cont [13/16] %v257, 128
        %306 = vxpose.xlu0.b32.cont [14/16] %v258, 128
        %307 = vxpose.xlu0.b32.cont [15/16] %v259, 128
        %308 = vxpose.xlu0.b32.end [16/16] %v260, 128
        %v309 = vpop.trf.xlu0
        %v310 = vpop.trf.xlu0
        %v311 = vpop.trf.xlu0
        %v312 = vpop.trf.xlu0
        %v313 = vpop.trf.xlu0
        %v314 = vpop.trf.xlu0
        %v315 = vpop.trf.xlu0
        %v316 = vpop.trf.xlu0
        %v317 = vpop.trf.xlu0
        %v318 = vpop.trf.xlu0
        %v319 = vpop.trf.xlu0
        %v320 = vpop.trf.xlu0
        %v321 = vpop.trf.xlu0
        %v322 = vpop.trf.xlu0
        %v323 = vpop.trf.xlu0
        %v324 = vpop.trf.xlu0
        %v325 = vld [vmem:[%s223] sm:$0x3]
        %v326 = vld [vmem:[%s2] sm:$0xff]
        %v327 = vrot.slane %v277, 4
        %v328 = vmax.f32 %v277, %v327
        %v329 = vrot.slane %v328, 2
        %v330 = vmax.f32 %v328, %v329
        %v331 = vrot.slane %v330, 1
        %v332 = vmax.f32 %v330, %v331
        %v333 = vrot.slane %v309, 4
        %v334 = vmax.f32 %v309, %v333
        %v335 = vrot.slane %v334, 2
        %v336 = vmax.f32 %v334, %v335
        %v337 = vrot.slane %v336, 1
        %v338 = vmax.f32 %v336, %v337
        %v339 = vsub.f32 %v277, %v332
        %v340 = vsub.f32 %v309, %v338
        %v341 = vmul.f32 %v339, 1.442695
        %v342 = vpow.pop %v341
        %v343 = vmul.f32 %v340, 1.442695
        %v344 = vpow.pop %v343
        %v345 = vrot.slane %v342, 4
        %v346 = vadd.f32 %v342, %v345
        %v347 = vrot.slane %v346, 2
        %v348 = vadd.f32 %v346, %v347
        %v349 = vrot.slane %v348, 1
        %v350 = vadd.f32 %v348, %v349
        %v351 = vrot.slane %v344, 4
        %v352 = vadd.f32 %v344, %v351
        %v353 = vrot.slane %v352, 2
        %v354 = vadd.f32 %v352, %v353
        %v355 = vrot.slane %v354, 1
        %v356 = vadd.f32 %v354, %v355
        %v357 = vlog2.pop %v350
        %v358 = vmul.f32 %v357, 0.6931472
        %v359 = vlog2.pop %v356
        %v360 = vmul.f32 %v359, 0.6931472
        %v361 = vadd.f32 %v358, %v332
        %v362 = vadd.f32 %v360, %v338
        %v363 = vmul.f32 %v326, 0.9125
        %v364 = vmul.f32 %v326, 0.0125
        %v365 = vlaneseq
        %v366 = vshrl.u32 %v365, 7
        %v367 = vlaneseq
        %v368 = vshrl.u32 %v367, 7
        %v369 = vsub.s32 0, %v368
        %v370 = vrot.slane %v325, %v369
        %v371 = vlaneseq
        %v372 = vshrl.u32 %v371, 7
        %v373 = vsub.s32 1, %v372
        %v374 = vrot.slane %v325, %v373
        %vm375 = vcmp.eq.s32.totalorder %v366, %v370
        %vm376 = vcmp.eq.s32.totalorder %v366, %v374
        %378 = vset.pattern.permute.xlu0 0
        %379 = vperm.xlu0 %378, %v363
        %v380 = vpop.permute.xlu0 %379
        %383 = vset.pattern.permute.xlu0 0
        %384 = vperm.xlu0 %383, %v364
        %v385 = vpop.permute.xlu0 %384
        %v387 = vsel %vm375, %v380, %v385
        %v388 = vsel %vm376, %v380, %v385
        %v389 = vsub.f32 %v361, %v277
        %v390 = vsub.f32 %v362, %v309
        %v391 = vmul.f32 %v387, %v389
        %v392 = vmul.f32 %v388, %v390
        %v393 = vrot.slane %v391, 4
        %v394 = vadd.f32 %v391, %v393
        %v395 = vrot.slane %v394, 2
        %v396 = vadd.f32 %v394, %v395
        %v397 = vrot.slane %v396, 1
        %v398 = vadd.f32 %v396, %v397
        %v399 = vrot.slane %v392, 4
        %v400 = vadd.f32 %v392, %v399
        %v401 = vrot.slane %v400, 2
        %v402 = vadd.f32 %v400, %v401
        %v403 = vrot.slane %v402, 1
        %v404 = vadd.f32 %v402, %v403
        %v405 = vsub.f32 0.0, %v398
        %v406 = vsub.f32 0.0, %v404
        %v407 = vmul.f32 %v405, 1.442695
        %v408 = vpow.pop %v407
        %v409 = vmul.f32 %v406, 1.442695
        %v410 = vpow.pop %v409
        %v411 = vsub.f32 1.0, %v408
        %v412 = vsub.f32 1.0, %v410
        %v413 = vmul.f32 %v411, %v411
        %v414 = vmul.f32 %v412, %v412
        %v415 = vmul.f32 %v413, %v398
        %v416 = vmul.f32 %v414, %v404
        %s417 = smul.u32 %s17, 256
        %v418 = vlaneseq
        %v419 = vand.u32 %v418, 127
        %v420 = vadd.s32 %v419, 128
        %v421 = vstv %s417
        %v422 = vadd.s32 %v421, %v419
        %v423 = vadd.s32 %v421, %v420
        %vm424 = vcmp.lt.s32.totalorder %v422, 384
        %vm425 = vcmp.lt.s32.totalorder %v423, 384
        %v426 = vsel %vm424, %v415, 0.0
        %v427 = vsel %vm425, %v416, 0.0
        %vm428 = vcmask 1040384
        %v429 = vsel %vm428, %v426, 0.0
        %v430 = vsel %vm428, %v427, 0.0
        %v431 = vadd.f32 %v429, %v430
        %432 = vadd.xlane.f32.xlu0 %v431
        %v433 = vpop.xlane.xlu0 %432
        %v434 = vrot.slane %v433, 4
        %v435 = vadd.f32 %v433, %v434
        %v436 = vrot.slane %v435, 2
        %v437 = vadd.f32 %v435, %v436
        %v438 = vrot.slane %v437, 1
        %v439 = vadd.f32 %v437, %v438
        %s440 = vtos %v439
        %vm441 = vcmp.eq.s32.totalorder %v419, 0
        %v442 = vstv %s440
        %v443 = vsel %vm441, %v442, 0.0
        %444 = vst [vmem:[%s201] sm:$0x1] %v443
        %s445 = sand.u32 %s98, 1
        %s446 = scalar_lea.sflag [#allocation3], %s445
        %s447 = sand.u32 %s98, 1
        %s448 = scalar_lea.vmem [#allocation2], %s447
        // Predicated region
        $region33: #{tpu_custom_call.1} parent=31 // pred_check
          %p449 = pneg %p108
        $region34: #{tpu_custom_call.1} parent=31 // pred_check_branch
          %451 = sbr.rel (%p449) target = $region36
        $region35: #{tpu_custom_call.1} parent=31 // pred_region
          %s453 = ssub.s32 16, 16
          %454 = vsyncadd %s446, %s453
          %s455 = smul.addr %s17, 16
          %s456 = scalar_lea.hbm %s3, %s455
          %s458 = sshll.u32 %s448, 4
          %s459 = int_to_ptr.vmem [resolvable:$true] %s458
          %461 = dma.vmem_to_hbm [thread:$0]  %s459, 16, %s456, %s446
        $region36: #{tpu_custom_call.1} parent=31 // pred_fallthru
          _
      $region32: #{tpu_custom_call.1} parent=5 // pred_fallthru
        _
      %p462 = scmp.le.s32.totalorder 2, %s12
      // Predicated region
      $region37: #{tpu_custom_call.1} parent=5 // pred_check
        %p463 = pneg %p462
      $region38: #{tpu_custom_call.1} parent=5 // pred_check_branch
        %465 = sbr.rel (%p463) target = $region40
      $region39: #{tpu_custom_call.1} parent=5 // pred_region
        %s466 = ssub.s32 %s12, 2
        // Predicated region
        $region41: #{tpu_custom_call.1} parent=39 // pred_check
          %p467 = pneg %p114
        $region42: #{tpu_custom_call.1} parent=39 // pred_check_branch
          %469 = sbr.rel (%p467) target = $region44
        $region43: #{tpu_custom_call.1} parent=39 // pred_region
          %s470 = sand.u32 %s99, 1
          %s471 = scalar_lea.sflag [#allocation3], %s470
          %s472 = sand.u32 %s99, 1
          %s473 = scalar_lea.vmem [#allocation2], %s472
          %474 = dma.done %s471, 16
        $region44: #{tpu_custom_call.1} parent=39 // pred_fallthru
          _
      $region40: #{tpu_custom_call.1} parent=5 // pred_fallthru
        _
    $region6: #{tpu_custom_call.1} parent=1 // loop_footer
      %s16 = sadd.s32 1, %s12
    $region7: #{tpu_custom_call.1} parent=1 // loop_footer_branch
      %11 = sbr.rel target = $region3
    $region8: #{tpu_custom_call.1} parent=1 // loop_exit
      _
    %475 = vsyncpa [#allocation3], 1
    %s476 = scalar_lea.sflag [#allocation3], 1
    %477 = vsyncpa %s476, 1

</llo_original>
